<compile_context>
chip_gen: v7x
topology: tpu7x:2x2x1
jax: 0.10.0
libtpu: 0.0.40
codegen_flags: <defaults>
</compile_context>

<pallas_src>
import functools

import numpy as np
import jax
import jax.numpy as jnp
from jax import lax
from jax.experimental import pallas as pl
from jax.experimental.pallas import tpu as pltpu

LANE = 128
SUBLANE = 8


def _round_up(x, m):
    return ((x + m - 1) // m) * m


def _pad2d(x, rows, cols):
    r, c = x.shape
    return jnp.pad(x, ((0, rows - r), (0, cols - c)))


def _vmem_limit(est_bytes):
    # Right-size the scoped VMEM request; never ask for the whole 64 MiB (v7x).
    return int(min(48 << 20, max(est_bytes, 16 << 20)))


def _pick_row_tile(n_pad, per_row_bytes, resident_bytes, cap=1024, budget=36 << 20):
    """Largest row tile (multiple of 128, divides n_pad) that fits the VMEM budget."""
    candidates = ([n_pad] if n_pad <= cap else []) + \
                 [c for c in (2048, 1024, 512, 256, 128) if c <= cap]
    for tm in candidates:
        if n_pad % tm == 0 and resident_bytes + tm * per_row_bytes <= budget:
            return tm
    return 128  # always divides n_pad (n_pad is a multiple of 128)


# ----------------------------------------------------------------------------
# Kernel 1: per-node feature transform  Z1 = X @ W1   (row-tiled, weight resident)
# ----------------------------------------------------------------------------
def _transform_kernel(x_ref, w_ref, o_ref):
    o_ref[...] = jnp.dot(x_ref[...], w_ref[...],
                         preferred_element_type=jnp.float32).astype(o_ref.dtype)


def _transform(x_bf, w_bf, *, tm, vmem_limit):
    n, f = x_bf.shape
    h = w_bf.shape[1]
    return pl.pallas_call(
        _transform_kernel,
        out_shape=jax.ShapeDtypeStruct((n, h), jnp.bfloat16),
        grid_spec=pltpu.PrefetchScalarGridSpec(
            num_scalar_prefetch=0,
            grid=(n // tm,),
            in_specs=[pl.BlockSpec((tm, f), lambda i: (i, 0)),
                      pl.BlockSpec((f, h), lambda i: (0, 0))],   # W1 stays resident
            out_specs=pl.BlockSpec((tm, h), lambda i: (i, 0)),
        ),
        compiler_params=pltpu.CompilerParams(
            dimension_semantics=("parallel",),
            vmem_limit_bytes=vmem_limit),
    )(x_bf, w_bf)


# ----------------------------------------------------------------------------
# Kernel 2: GCN layer 1 aggregate fused with the layer-2 transform.
#   Z2_tile = relu(A_tile @ Z1 + b1) @ W2      (Z1 / b1 / W2 VMEM-resident)
# ----------------------------------------------------------------------------
def _gcn1_kernel(a_ref, z1_ref, b1_ref, w2_ref, z2_ref):
    h1 = jnp.dot(a_ref[...], z1_ref[...], preferred_element_type=jnp.float32)
    h1 = jnp.maximum(h1 + b1_ref[...], 0.0).astype(jnp.bfloat16)
    z2_ref[...] = jnp.dot(h1, w2_ref[...],
                          preferred_element_type=jnp.float32).astype(z2_ref.dtype)


def _gcn1(a_bf, z1_bf, b1_f, w2_bf, *, tm, vmem_limit):
    n = a_bf.shape[0]
    h = z1_bf.shape[1]
    flops = 2 * n * n * h + 2 * n * h * h
    bytes_accessed = 2 * a_bf.size + 2 * z1_bf.size + 2 * w2_bf.size + 2 * n * h
    return pl.pallas_call(
        _gcn1_kernel,
        out_shape=jax.ShapeDtypeStruct((n, h), jnp.bfloat16),
        grid_spec=pltpu.PrefetchScalarGridSpec(
            num_scalar_prefetch=0,
            grid=(n // tm,),
            in_specs=[pl.BlockSpec((tm, n), lambda i: (i, 0)),
                      pl.BlockSpec((n, h), lambda i: (0, 0)),    # Z1 resident
                      pl.BlockSpec((1, h), lambda i: (0, 0)),    # b1 resident
                      pl.BlockSpec((h, h), lambda i: (0, 0))],   # W2 resident
            out_specs=pl.BlockSpec((tm, h), lambda i: (i, 0)),
        ),
        compiler_params=pltpu.CompilerParams(
            dimension_semantics=("parallel",),
            vmem_limit_bytes=vmem_limit),
        cost_estimate=pl.CostEstimate(flops=flops, transcendentals=0,
                                      bytes_accessed=bytes_accessed),
    )(a_bf, z1_bf, b1_f, w2_bf)


# ----------------------------------------------------------------------------
# Kernel 3: GCN layer 2 aggregate fused with the mean-pool (partial sums).
#   H2_tile  = relu(A_tile @ Z2 + b2)          (never written to HBM)
#   Gpart[i] = P[:, i-th tile] @ H2_tile       (parallel-safe per-tile partials)
# ----------------------------------------------------------------------------
def _gcn2_pool_kernel(a_ref, z2_ref, b2_ref, p_ref, gp_ref):
    h2 = jnp.dot(a_ref[...], z2_ref[...], preferred_element_type=jnp.float32)
    h2 = jnp.maximum(h2 + b2_ref[...], 0.0).astype(jnp.bfloat16)
    gp = jnp.dot(p_ref[...], h2, preferred_element_type=jnp.float32)
    gp_ref[...] = gp.reshape(gp_ref.shape)


def _gcn2_pool(a_bf, z2_bf, b2_f, p_bf, *, tm, vmem_limit):
    n = a_bf.shape[0]
    h = z2_bf.shape[1]
    g = p_bf.shape[0]
    n_tiles = n // tm
    flops = 2 * n * n * h + 2 * g * n * h
    bytes_accessed = 2 * a_bf.size + 2 * z2_bf.size + 2 * p_bf.size + 4 * n_tiles * g * h
    return pl.pallas_call(
        _gcn2_pool_kernel,
        out_shape=jax.ShapeDtypeStruct((n_tiles, g, h), jnp.float32),
        grid_spec=pltpu.PrefetchScalarGridSpec(
            num_scalar_prefetch=0,
            grid=(n_tiles,),
            in_specs=[pl.BlockSpec((tm, n), lambda i: (i, 0)),
                      pl.BlockSpec((n, h), lambda i: (0, 0)),     # Z2 resident
                      pl.BlockSpec((1, h), lambda i: (0, 0)),     # b2 resident
                      pl.BlockSpec((g, tm), lambda i: (0, i))],   # P column tile
            out_specs=pl.BlockSpec((1, g, h), lambda i: (i, 0, 0)),
        ),
        compiler_params=pltpu.CompilerParams(
            dimension_semantics=("parallel",),
            vmem_limit_bytes=vmem_limit),
        cost_estimate=pl.CostEstimate(flops=flops, transcendentals=0,
                                      bytes_accessed=bytes_accessed),
    )(a_bf, z2_bf, b2_f, p_bf)


# ----------------------------------------------------------------------------
# Kernel 4: tiny head — sum pool partials, fc1 + relu + fc2 + log_softmax.
# ----------------------------------------------------------------------------
def _head_kernel(gp_ref, wf1_ref, bf1_ref, wf2_ref, bf2_ref, o_ref, *, out_dim):
    g = jnp.sum(gp_ref[...], axis=0)                     # (g_pad, h_pad) f32
    f1 = jnp.dot(g.astype(jnp.bfloat16), wf1_ref[...],
                 preferred_element_type=jnp.float32) + bf1_ref[...]
    f1 = jnp.maximum(f1, 0.0)
    logits = jnp.dot(f1.astype(jnp.bfloat16), wf2_ref[...],
                     preferred_element_type=jnp.float32) + bf2_ref[...]
    # Mask lanes beyond the real class count so padding never enters softmax.
    col = lax.broadcasted_iota(jnp.int32, logits.shape, 1)
    logits = jnp.where(col < out_dim, logits, jnp.float32(-1e30))
    m = jnp.max(logits, axis=1, keepdims=True)
    s = logits - m
    lse = jnp.log(jnp.sum(jnp.exp(s), axis=1, keepdims=True))
    o_ref[...] = s - lse


def _head(g_partial, wf1_bf, bf1_f, wf2_bf, bf2_f, *, out_dim, vmem_limit):
    n_tiles, gp, hp = g_partial.shape
    op = wf2_bf.shape[1]
    return pl.pallas_call(
        functools.partial(_head_kernel, out_dim=out_dim),
        out_shape=jax.ShapeDtypeStruct((gp, op), jnp.float32),
        grid_spec=pltpu.PrefetchScalarGridSpec(
            num_scalar_prefetch=0,
            grid=(1,),
            in_specs=[pl.BlockSpec((n_tiles, gp, hp), lambda i: (0, 0, 0)),
                      pl.BlockSpec((hp, hp), lambda i: (0, 0)),
                      pl.BlockSpec((1, hp), lambda i: (0, 0)),
                      pl.BlockSpec((hp, op), lambda i: (0, 0)),
                      pl.BlockSpec((1, op), lambda i: (0, 0))],
            out_specs=pl.BlockSpec((gp, op), lambda i: (0, 0)),
        ),
        compiler_params=pltpu.CompilerParams(
            dimension_semantics=("arbitrary",),
            vmem_limit_bytes=vmem_limit),
    )(g_partial, wf1_bf, bf1_f, wf2_bf, bf2_f)


# ----------------------------------------------------------------------------
# Forward wrapper: pads/casts the small operands, chains the fused kernels.
# Expects the adjacency / pool matrices already padded + bf16 (built once).
# ----------------------------------------------------------------------------
def graph_classifier_forward(a_pad, pool_pad, x, params, num_graphs):
    w1, b1, w2, b2, wf1, bf1, wf2, bf2 = params
    n, f = x.shape
    hid = w1.shape[1]
    out_dim = wf2.shape[1]

    n_pad = a_pad.shape[0]
    g_pad = pool_pad.shape[0]
    f_pad = _round_up(f, LANE)
    h_pad = _round_up(hid, LANE)
    o_pad = _round_up(out_dim, LANE)

    bf16 = jnp.bfloat16
    x_p = _pad2d(x, n_pad, f_pad).astype(bf16)
    w1_p = _pad2d(w1, f_pad, h_pad).astype(bf16)
    w2_p = _pad2d(w2, h_pad, h_pad).astype(bf16)
    wf1_p = _pad2d(wf1, h_pad, h_pad).astype(bf16)
    wf2_p = _pad2d(wf2, h_pad, o_pad).astype(bf16)
    b1_p = _pad2d(b1, 1, h_pad).astype(jnp.float32)
    b2_p = _pad2d(b2, 1, h_pad).astype(jnp.float32)
    bf1_p = _pad2d(bf1, 1, h_pad).astype(jnp.float32)
    bf2_p = _pad2d(bf2, 1, o_pad).astype(jnp.float32)

    # --- tile / VMEM sizing (bytes; inputs & outputs double-buffered) -------
    t_per_row = 2 * (f_pad * 2) + 2 * (h_pad * 2)
    t_resident = 2 * f_pad * h_pad * 2
    tm_t = _pick_row_tile(n_pad, t_per_row, t_resident, cap=2048)
    t_limit = _vmem_limit(t_resident + tm_t * t_per_row + (2 << 20))

    g_per_row = 2 * (n_pad * 2) + 2 * (h_pad * 2) + 2 * (g_pad * 2)
    g_resident = 2 * n_pad * h_pad * 2 + h_pad * h_pad * 2 + 4 * g_pad * h_pad * 4
    tm = _pick_row_tile(n_pad, g_per_row, g_resident, cap=1024)
    g_limit = _vmem_limit(g_resident + tm * g_per_row + (2 << 20))

    # --- forward -------------------------------------------------------------
    z1 = _transform(x_p, w1_p, tm=tm_t, vmem_limit=t_limit)          # X @ W1
    z2 = _gcn1(a_pad, z1, b1_p, w2_p, tm=tm, vmem_limit=g_limit)     # relu(A z1 + b1) @ W2
    # dropout(p=0.5, training=False) -> identity (eval mode)
    g_partial = _gcn2_pool(a_pad, z2, b2_p, pool_pad, tm=tm, vmem_limit=g_limit)
    y = _head(g_partial, wf1_p, bf1_p, wf2_p, bf2_p, out_dim=out_dim,
              vmem_limit=_vmem_limit(4 * g_partial.size + (2 << 20)))
    return y[:num_graphs, :out_dim]


# ----------------------------- graph preprocessing ---------------------------
def build_normalized_adjacency_padded(edge_index, num_nodes, n_pad, dtype=jnp.bfloat16):
    """Dense D^-1/2 (A + I) D^-1/2 built directly in the padded buffer and emitted
    in the MXU dtype (no separate O(N^2) pad + cast pass). Padded rows/cols are 0."""
    src, dst = edge_index[0], edge_index[1]
    a = jnp.zeros((n_pad, n_pad), jnp.float32)
    a = a.at[dst, src].add(1.0)
    a = jnp.minimum(a, 1.0)                               # de-duplicate repeated edges
    self_loop = (jnp.arange(n_pad) < num_nodes).astype(jnp.float32)
    a = a + jnp.diag(self_loop)                           # self loops for real nodes only
    deg = jnp.sum(a, axis=1)
    dinv = jnp.where(deg > 0, lax.rsqrt(deg), 0.0)
    return (dinv[:, None] * a * dinv[None, :]).astype(dtype)


def build_pool_matrix_padded(batch, num_graphs, n_pad, g_pad, dtype=jnp.bfloat16):
    """Padded [g_pad, n_pad] mean-pool matrix; padded rows/cols are exactly zero."""
    n = batch.shape[0]
    b_pad = jnp.full((n_pad,), -1, jnp.int32).at[:n].set(batch.astype(jnp.int32))
    onehot = (b_pad[None, :] == jnp.arange(g_pad, dtype=jnp.int32)[:, None]).astype(jnp.float32)
    counts = jnp.maximum(jnp.sum(onehot, axis=1, keepdims=True), 1.0)
    return (onehot / counts).astype(dtype)


# ----------------------------- plain-JAX reference ---------------------------
def build_normalized_adjacency(edge_index, num_nodes):
    src, dst = edge_index[0], edge_index[1]
    a = jnp.zeros((num_nodes, num_nodes), jnp.float32)
    a = a.at[dst, src].add(1.0)
    a = jnp.minimum(a, 1.0)
    a = a + jnp.eye(num_nodes, dtype=jnp.float32)
    deg = jnp.sum(a, axis=1)
    dinv = jnp.where(deg > 0, 1.0 / jnp.sqrt(deg), 0.0)
    return dinv[:, None] * a * dinv[None, :]


def build_pool_matrix(batch, num_graphs):
    onehot = (batch[None, :] == jnp.arange(num_graphs)[:, None]).astype(jnp.float32)
    counts = jnp.maximum(jnp.sum(onehot, axis=1, keepdims=True), 1.0)
    return onehot / counts                                 # [G, N]


def init_params(key, input_dim, hidden_dim, output_dim):
    ks = jax.random.split(key, 8)

    def glorot(k, shape):
        lim = np.sqrt(6.0 / (shape[0] + shape[1]))
        return jax.random.uniform(k, shape, jnp.float32, -lim, lim)

    w1 = glorot(ks[0], (input_dim, hidden_dim))
    b1 = jnp.zeros((1, hidden_dim), jnp.float32)
    w2 = glorot(ks[1], (hidden_dim, hidden_dim))
    b2 = jnp.zeros((1, hidden_dim), jnp.float32)
    wf1 = glorot(ks[2], (hidden_dim, hidden_dim))
    bf1 = jax.random.uniform(ks[3], (1, hidden_dim), jnp.float32, -0.1, 0.1)
    wf2 = glorot(ks[4], (hidden_dim, output_dim))
    bf2 = jax.random.uniform(ks[5], (1, output_dim), jnp.float32, -0.1, 0.1)
    return (w1, b1, w2, b2, wf1, bf1, wf2, bf2)


def reference_forward(a_norm, x, pool, params):
    """Mirrors the kernels' quantization points (bf16 MXU operands, f32 accumulate)."""
    w1, b1, w2, b2, wf1, bf1, wf2, bf2 = params

    def bf(t):
        return t.astype(jnp.bfloat16).astype(jnp.float32)

    def mm(lhs, rhs):
        return jnp.dot(bf(lhs), bf(rhs), precision=lax.Precision.HIGHEST)

    z1 = bf(mm(x, w1))
    h1 = bf(jnp.maximum(mm(a_norm, z1) + b1, 0.0))
    z2 = bf(mm(h1, w2))
    h2 = bf(jnp.maximum(mm(a_norm, z2) + b2, 0.0))
    g = mm(pool, h2)
    f1 = jnp.maximum(mm(g, wf1) + bf1, 0.0)
    logits = mm(f1, wf2) + bf2
    return jax.nn.log_softmax(logits, axis=1)


if __name__ == "__main__":
    key = jax.random.PRNGKey(0)
    num_nodes, input_dim, hidden_dim, output_dim, num_graphs = 16, 8, 32, 4, 2

    k_x, k_p = jax.random.split(key, 2)
    x = jax.random.normal(k_x, (num_nodes, input_dim), jnp.float32)

    # Deterministic ring graph (undirected edges listed both ways).
    src = jnp.arange(num_nodes, dtype=jnp.int32)
    dst = (src + 1) % num_nodes
    edge_index = jnp.stack([jnp.concatenate([src, dst]),
                            jnp.concatenate([dst, src])], axis=0)   # [2, 2N]

    batch = (jnp.arange(num_nodes) >= num_nodes // 2).astype(jnp.int32)  # 2 graphs

    n_pad = _round_up(num_nodes, LANE)
    g_pad = _round_up(num_graphs, SUBLANE)

    # Built once, directly padded + bf16 (kernel operands).
    a_pad = build_normalized_adjacency_padded(edge_index, num_nodes, n_pad)
    pool_pad = build_pool_matrix_padded(batch, num_graphs, n_pad, g_pad)
    params = init_params(k_p, input_dim, hidden_dim, output_dim)

    out = graph_classifier_forward(a_pad, pool_pad, x, params, num_graphs)
    out = jax.block_until_ready(out)

    # Reference path (f32, unpadded math with matching quantization points).
    a_norm = build_normalized_adjacency(edge_index, num_nodes)
    pool = build_pool_matrix(batch, num_graphs)
    ref = reference_forward(a_norm, x, pool, params)
    np.testing.assert_allclose(np.asarray(out), np.asarray(ref), rtol=1e-3, atol=1e-3)

    print("KERNEL_OK")
</pallas_src>

<mosaic_0001>
module attributes {stable_mosaic.version = 11 : i64} {
  func.func @_transform_kernel(%arg0: i32, %arg1: memref<128x128xbf16, #tpu.memory_space<vmem>>, %arg2: memref<128x128xbf16, #tpu.memory_space<vmem>>, %arg3: memref<128x128xbf16, #tpu.memory_space<vmem>>) attributes {dimension_semantics = [#tpu.dimension_semantics<parallel>], iteration_bounds = array<i64: 1>, scalar_prefetch = 0 : i64, scratch_operands = 0 : i64, tpu.core_type = #tpu.core_type<tc>, window_params = [{transform_indices = @transform_0, window_bounds = array<i64: 128, 128>}, {pipeline_mode = #tpu.pipeline_mode<synchronous>, transform_indices = @transform_1, window_bounds = array<i64: 128, 128>}, {transform_indices = @transform_2, window_bounds = array<i64: 128, 128>}]} {
    %c0 = arith.constant 0 : index
    %c0_0 = arith.constant 0 : index
    %0 = vector.load %arg1[%c0, %c0_0] : memref<128x128xbf16, #tpu.memory_space<vmem>>, vector<128x128xbf16>
    %c0_1 = arith.constant 0 : index
    %c0_2 = arith.constant 0 : index
    %1 = vector.load %arg2[%c0_1, %c0_2] : memref<128x128xbf16, #tpu.memory_space<vmem>>, vector<128x128xbf16>
    %cst = arith.constant dense<0.000000e+00> : vector<128x128xf32>
    %2 = tpu.matmul %0, %1, %cst {dimension_numbers = #tpu.dot_dimension_numbers<[1], [0], [0], [1], [0, 0, 1, 1], [], []>} : vector<128x128xbf16>, vector<128x128xbf16>, vector<128x128xf32> -> vector<128x128xf32>
    %3 = arith.truncf %2 : vector<128x128xf32> to vector<128x128xbf16>
    %c0_3 = arith.constant 0 : index
    %c0_4 = arith.constant 0 : index
    %4 = vector.load %arg3[%c0_3, %c0_4] : memref<128x128xbf16, #tpu.memory_space<vmem>>, vector<128x128xbf16>
    tpu.vector_store %arg3[%c0_3, %c0_4], %3 {strides = array<i32>} : memref<128x128xbf16, #tpu.memory_space<vmem>>, vector<128x128xbf16>,
    return
  }
  func.func @transform_0(%arg0: i32) -> (i32, i32) {
    %c0_i32 = arith.constant 0 : i32
    %c0_i32_0 = arith.constant 0 : i32
    return %arg0, %c0_i32 : i32, i32
  }
  func.func @transform_1(%arg0: i32) -> (i32, i32) {
    %c0_i32 = arith.constant 0 : i32
    %c0_i32_0 = arith.constant 0 : i32
    %c0_i32_1 = arith.constant 0 : i32
    return %c0_i32, %c0_i32_0 : i32, i32
  }
  func.func @transform_2(%arg0: i32) -> (i32, i32) {
    %c0_i32 = arith.constant 0 : i32
    %c0_i32_0 = arith.constant 0 : i32
    return %arg0, %c0_i32 : i32, i32
  }
}

</mosaic_0001>

<llo_original>
// kernel: tpu_custom_call.1
$region0: #{tpu_custom_call.1}
  #allocation0 [shape = 'u32[]', space=smem, size = 0x4, offset = 0x4, fixed_abs, tag = 'smem constant byte address 0x4 - core index']
  #allocation1 [shape = 'u32[144,128]{1,0:T(1,128)}', space=vmem, size = 0x12000, scoped, tag = 'internal scratch']
  %s0 = inlined_call_operand.hbm [shape: bf16[128,128], index: 0, kind: input, shape index: {}]
  %s1 = inlined_call_operand.hbm [shape: bf16[128,128], index: 1, kind: input, shape index: {}]
  %s2 = inlined_call_operand.hbm [shape: bf16[128,128], index: 2, kind: output, shape index: {}]
  %s3 = sld [smem:[#allocation0]]
  $region26: #{tpu_custom_call.1} parent=0
    _
  %s5 = ssub.s32 1, %s3
  %s6 = scalar_select 0, %s5, %s3
  $region1: #{tpu_custom_call.1} parent=0
    #allocation2 [shape = 'u8[32768]{0}', space=vmem, size = 0x8000, scoped, tag = 'input window, operand 0, single buffered']
    #allocation3 [shape = 's32[1]{0}', space=sflag, size = 0x4, scoped, tag = 'scoped memory for tpu_custom_call.1']
    #allocation4 [shape = 's32[1]{0}', space=sflag, size = 0x4, scoped, tag = 'scoped memory for tpu_custom_call.1']
    #allocation5 [shape = 'u8[32768]{0}', space=vmem, size = 0x8000, scoped, tag = 'input window, operand 1, single buffered']
    #allocation6 [shape = 's32[1]{0}', space=sflag, size = 0x4, scoped, tag = 'scoped memory for tpu_custom_call.1']
    #allocation7 [shape = 'u8[32768]{0}', space=vmem, size = 0x8000, scoped, tag = 'output window, operand 0, single buffered']
    %7 = vsyncpa [#allocation3], 0
    %8 = vsyncpa [#allocation6], 0
    %9 = vsyncpa [#allocation4], 0
    // Predicated region
    $region2: #{tpu_custom_call.1} parent=1 // pred_check
      _
    $region3: #{tpu_custom_call.1} parent=1 // pred_check_branch
      %11 = sbr.rel (0) target = $region5
    $region4: #{tpu_custom_call.1} parent=1 // pred_region
      %s13 = ssub.s32 1024, 1024
      %14 = vsyncadd [#allocation3], %s13
      %s15 = sshll.u32 [#allocation2], 4
      %s16 = int_to_ptr.vmem [resolvable:$true] %s15
      %21 = dma.hbm_to_vmem [thread:$0]  %s0, 1024, %s16, [#allocation3], 64, 64, 4
    $region5: #{tpu_custom_call.1} parent=1 // pred_fallthru
      _
    // Predicated region
    $region6: #{tpu_custom_call.1} parent=1 // pred_check
      _
    $region7: #{tpu_custom_call.1} parent=1 // pred_check_branch
      %23 = sbr.rel (0) target = $region9
    $region8: #{tpu_custom_call.1} parent=1 // pred_region
      %s25 = ssub.s32 1024, 1024
      %26 = vsyncadd [#allocation6], %s25
      %s27 = sshll.u32 [#allocation5], 4
      %s28 = int_to_ptr.vmem [resolvable:$true] %s27
      %33 = dma.hbm_to_vmem [thread:$0]  %s1, 1024, %s28, [#allocation6], 64, 64, 4
    $region9: #{tpu_custom_call.1} parent=1 // pred_fallthru
      _
    // Predicated region
    $region10: #{tpu_custom_call.1} parent=1 // pred_check
      _
    $region11: #{tpu_custom_call.1} parent=1 // pred_check_branch
      %35 = sbr.rel (0) target = $region13
    $region12: #{tpu_custom_call.1} parent=1 // pred_region
      %36 = dma.done [#allocation3], 1024
    $region13: #{tpu_custom_call.1} parent=1 // pred_fallthru
      _
    // Predicated region
    $region14: #{tpu_custom_call.1} parent=1 // pred_check
      _
    $region15: #{tpu_custom_call.1} parent=1 // pred_check_branch
      %38 = sbr.rel (0) target = $region17
    $region16: #{tpu_custom_call.1} parent=1 // pred_region
      %39 = dma.done [#allocation6], 1024
    $region17: #{tpu_custom_call.1} parent=1 // pred_fallthru
      _
    %v41 = vld [vmem:[#allocation2] sm:$0xf]
    %v42 = vld [vmem:[#allocation2 + $0x4] sm:$0xf]
    %v43 = vld [vmem:[#allocation2 + $0x8] sm:$0xf]
    %v44 = vld [vmem:[#allocation2 + $0xc] sm:$0xf]
    %v45 = vld [vmem:[#allocation2 + $0x10] sm:$0xf]
    %v46 = vld [vmem:[#allocation2 + $0x14] sm:$0xf]
    %v47 = vld [vmem:[#allocation2 + $0x18] sm:$0xf]
    %v48 = vld [vmem:[#allocation2 + $0x1c] sm:$0xf]
    %v49 = vld [vmem:[#allocation2 + $0x20] sm:$0xf]
    %v50 = vld [vmem:[#allocation2 + $0x24] sm:$0xf]
    %v51 = vld [vmem:[#allocation2 + $0x28] sm:$0xf]
    %v52 = vld [vmem:[#allocation2 + $0x2c] sm:$0xf]
    %v53 = vld [vmem:[#allocation2 + $0x30] sm:$0xf]
    %v54 = vld [vmem:[#allocation2 + $0x34] sm:$0xf]
    %v55 = vld [vmem:[#allocation2 + $0x38] sm:$0xf]
    %v56 = vld [vmem:[#allocation2 + $0x3c] sm:$0xf]
    %v57 = vld [vmem:[#allocation5] sm:$0xf]
    %v58 = vld [vmem:[#allocation5 + $0x4] sm:$0xf]
    %v59 = vld [vmem:[#allocation5 + $0x8] sm:$0xf]
    %v60 = vld [vmem:[#allocation5 + $0xc] sm:$0xf]
    %v61 = vld [vmem:[#allocation5 + $0x10] sm:$0xf]
    %v62 = vld [vmem:[#allocation5 + $0x14] sm:$0xf]
    %v63 = vld [vmem:[#allocation5 + $0x18] sm:$0xf]
    %v64 = vld [vmem:[#allocation5 + $0x1c] sm:$0xf]
    %v65 = vld [vmem:[#allocation5 + $0x20] sm:$0xf]
    %v66 = vld [vmem:[#allocation5 + $0x24] sm:$0xf]
    %v67 = vld [vmem:[#allocation5 + $0x28] sm:$0xf]
    %v68 = vld [vmem:[#allocation5 + $0x2c] sm:$0xf]
    %v69 = vld [vmem:[#allocation5 + $0x30] sm:$0xf]
    %v70 = vld [vmem:[#allocation5 + $0x34] sm:$0xf]
    %v71 = vld [vmem:[#allocation5 + $0x38] sm:$0xf]
    %v72 = vld [vmem:[#allocation5 + $0x3c] sm:$0xf]
    %v89 = vunpack.c.l.b16 %v41
    %v90 = vunpack.c.l.b16 %v42
    %v91 = vunpack.c.l.b16 %v43
    %v92 = vunpack.c.l.b16 %v44
    %v93 = vunpack.c.l.b16 %v45
    %v94 = vunpack.c.l.b16 %v46
    %v95 = vunpack.c.l.b16 %v47
    %v96 = vunpack.c.l.b16 %v48
    %v97 = vunpack.c.l.b16 %v49
    %v98 = vunpack.c.l.b16 %v50
    %v99 = vunpack.c.l.b16 %v51
    %v100 = vunpack.c.l.b16 %v52
    %v101 = vunpack.c.l.b16 %v53
    %v102 = vunpack.c.l.b16 %v54
    %v103 = vunpack.c.l.b16 %v55
    %v104 = vunpack.c.l.b16 %v56
    %v105 = vpack.c.b16 %v90, %v89
    %v106 = vpack.c.b16 %v92, %v91
    %v107 = vpack.c.b16 %v94, %v93
    %v108 = vpack.c.b16 %v96, %v95
    %v109 = vpack.c.b16 %v98, %v97
    %v110 = vpack.c.b16 %v100, %v99
    %v111 = vpack.c.b16 %v102, %v101
    %v112 = vpack.c.b16 %v104, %v103
    %v137 = vunpack.c.l.b16 %v57
    %v138 = vunpack.c.l.b16 %v58
    %v139 = vunpack.c.l.b16 %v59
    %v140 = vunpack.c.l.b16 %v60
    %v141 = vunpack.c.l.b16 %v61
    %v142 = vunpack.c.l.b16 %v62
    %v143 = vunpack.c.l.b16 %v63
    %v144 = vunpack.c.l.b16 %v64
    %v145 = vunpack.c.l.b16 %v65
    %v146 = vunpack.c.l.b16 %v66
    %v147 = vunpack.c.l.b16 %v67
    %v148 = vunpack.c.l.b16 %v68
    %v149 = vunpack.c.l.b16 %v69
    %v150 = vunpack.c.l.b16 %v70
    %v151 = vunpack.c.l.b16 %v71
    %v152 = vunpack.c.l.b16 %v72
    %v153 = vpack.c.b16 %v138, %v137
    %v154 = vpack.c.b16 %v140, %v139
    %v155 = vpack.c.b16 %v142, %v141
    %v156 = vpack.c.b16 %v144, %v143
    %v157 = vpack.c.b16 %v146, %v145
    %v158 = vpack.c.b16 %v148, %v147
    %v159 = vpack.c.b16 %v150, %v149
    %v160 = vpack.c.b16 %v152, %v151
    %169 = vmatprep.subr.bf16.mxu0 0
    %170 = vmatpush1.bf16.msra.mxu0 %v153
    %171 = vmatprep.subr.bf16.mxu0 0
    %172 = vmatpush1.bf16.msra.mxu0 %v154
    %173 = vmatprep.subr.bf16.mxu0 0
    %174 = vmatpush1.bf16.msra.mxu0 %v155
    %175 = vmatprep.subr.bf16.mxu0 0
    %176 = vmatpush1.bf16.msra.mxu0 %v156
    %177 = vmatprep.subr.bf16.mxu0 0
    %178 = vmatpush1.bf16.msra.mxu0 %v157
    %179 = vmatprep.subr.bf16.mxu0 0
    %180 = vmatpush1.bf16.msra.mxu0 %v158
    %181 = vmatprep.subr.bf16.mxu0 0
    %182 = vmatpush1.bf16.msra.mxu0 %v159
    %183 = vmatprep.subr.bf16.mxu0 0
    %184 = vmatpush1.bf16.msra.mxu0 %v160
    %185 = vmatprep.subr.bf16.mxu0 0
    %186 = vmatpush1.bf16.msra.mxu0 0
    %187 = vmatprep.subr.bf16.mxu0 0
    %188 = vmatpush1.bf16.msra.mxu0 0
    %189 = vmatprep.subr.bf16.mxu0 0
    %190 = vmatpush1.bf16.msra.mxu0 0
    %191 = vmatprep.subr.bf16.mxu0 0
    %192 = vmatpush1.bf16.msra.mxu0 0
    %193 = vmatprep.subr.bf16.mxu0 0
    %194 = vmatpush1.bf16.msra.mxu0 0
    %195 = vmatprep.subr.bf16.mxu0 0
    %196 = vmatpush1.bf16.msra.mxu0 0
    %197 = vmatprep.subr.bf16.mxu0 0
    %198 = vmatpush1.bf16.msra.mxu0 0
    %199 = vmatprep.subr.bf16.mxu0 0
    %200 = vmatpush1.bf16.msra.mxu0 0
    %201 = vmatprep.mubr.bf16.mxu0 0
    %202 = vmatmul.mubr.bf16.gmra.mrb[0].mxu0 %v105
    %v203 = vpop.f32.mrb[0].mxu0
    %v204 = vadd.f32 0.0, %v203
    %v205 = vpop.f32.mrb[0].mxu0
    %v206 = vpop.f32.mrb[0].mxu0
    %v207 = vadd.f32 0.0, %v206
    %v208 = vpop.f32.mrb[0].mxu0
    %209 = vmatprep.mubr.bf16.mxu0 0
    %210 = vmatmul.mubr.bf16.gmra.mrb[0].mxu0 %v106
    %v211 = vpop.f32.mrb[0].mxu0
    %v212 = vadd.f32 0.0, %v211
    %v213 = vpop.f32.mrb[0].mxu0
    %v214 = vpop.f32.mrb[0].mxu0
    %v215 = vadd.f32 0.0, %v214
    %v216 = vpop.f32.mrb[0].mxu0
    %217 = vmatprep.mubr.bf16.mxu0 0
    %218 = vmatmul.mubr.bf16.gmra.mrb[0].mxu0 %v107
    %v219 = vpop.f32.mrb[0].mxu0
    %v220 = vadd.f32 0.0, %v219
    %v221 = vpop.f32.mrb[0].mxu0
    %v222 = vpop.f32.mrb[0].mxu0
    %v223 = vadd.f32 0.0, %v222
    %v224 = vpop.f32.mrb[0].mxu0
    %225 = vmatprep.mubr.bf16.mxu0 0
    %226 = vmatmul.mubr.bf16.gmra.mrb[0].mxu0 %v108
    %v227 = vpop.f32.mrb[0].mxu0
    %v228 = vadd.f32 0.0, %v227
    %v229 = vpop.f32.mrb[0].mxu0
    %v230 = vpop.f32.mrb[0].mxu0
    %v231 = vadd.f32 0.0, %v230
    %v232 = vpop.f32.mrb[0].mxu0
    %233 = vmatprep.mubr.bf16.mxu0 0
    %234 = vmatmul.mubr.bf16.gmra.mrb[0].mxu0 %v109
    %v235 = vpop.f32.mrb[0].mxu0
    %v236 = vadd.f32 0.0, %v235
    %v237 = vpop.f32.mrb[0].mxu0
    %v238 = vpop.f32.mrb[0].mxu0
    %v239 = vadd.f32 0.0, %v238
    %v240 = vpop.f32.mrb[0].mxu0
    %241 = vmatprep.mubr.bf16.mxu0 0
    %242 = vmatmul.mubr.bf16.gmra.mrb[0].mxu0 %v110
    %v243 = vpop.f32.mrb[0].mxu0
    %v244 = vadd.f32 0.0, %v243
    %v245 = vpop.f32.mrb[0].mxu0
    %v246 = vpop.f32.mrb[0].mxu0
    %v247 = vadd.f32 0.0, %v246
    %v248 = vpop.f32.mrb[0].mxu0
    %249 = vmatprep.mubr.bf16.mxu0 0
    %250 = vmatmul.mubr.bf16.gmra.mrb[0].mxu0 %v111
    %v251 = vpop.f32.mrb[0].mxu0
    %v252 = vadd.f32 0.0, %v251
    %v253 = vpop.f32.mrb[0].mxu0
    %v254 = vpop.f32.mrb[0].mxu0
    %v255 = vadd.f32 0.0, %v254
    %v256 = vpop.f32.mrb[0].mxu0
    %257 = vmatprep.mubr.bf16.mxu0 0
    %258 = vmatmul.mubr.bf16.gmra.mrb[0].mxu0 %v112
    %v259 = vpop.f32.mrb[0].mxu0
    %v260 = vadd.f32 0.0, %v259
    %v261 = vpop.f32.mrb[0].mxu0
    %v262 = vpop.f32.mrb[0].mxu0
    %v263 = vadd.f32 0.0, %v262
    %v264 = vpop.f32.mrb[0].mxu0
    %265 = vdwg.mxu0
    %v266 = vpack.c.bf16 %v207, %v204
    %v267 = vpack.c.bf16 %v215, %v212
    %v268 = vpack.c.bf16 %v223, %v220
    %v269 = vpack.c.bf16 %v231, %v228
    %v270 = vpack.c.bf16 %v239, %v236
    %v271 = vpack.c.bf16 %v247, %v244
    %v272 = vpack.c.bf16 %v255, %v252
    %v273 = vpack.c.bf16 %v263, %v260
    %v282 = vunpack.c.l.b16 %v266
    %v283 = vunpack.c.h.b16 %v266
    %v284 = vunpack.c.l.b16 %v267
    %v285 = vunpack.c.h.b16 %v267
    %v286 = vunpack.c.l.b16 %v268
    %v287 = vunpack.c.h.b16 %v268
    %v288 = vunpack.c.l.b16 %v269
    %v289 = vunpack.c.h.b16 %v269
    %v290 = vunpack.c.l.b16 %v270
    %v291 = vunpack.c.h.b16 %v270
    %v292 = vunpack.c.l.b16 %v271
    %v293 = vunpack.c.h.b16 %v271
    %v294 = vunpack.c.l.b16 %v272
    %v295 = vunpack.c.h.b16 %v272
    %v296 = vunpack.c.l.b16 %v273
    %v297 = vunpack.c.h.b16 %v273
    %v298 = vpack.c.b16 %v282, %v282
    %v299 = vpack.c.b16 %v283, %v283
    %v300 = vpack.c.b16 %v284, %v284
    %v301 = vpack.c.b16 %v285, %v285
    %v302 = vpack.c.b16 %v286, %v286
    %v303 = vpack.c.b16 %v287, %v287
    %v304 = vpack.c.b16 %v288, %v288
    %v305 = vpack.c.b16 %v289, %v289
    %v306 = vpack.c.b16 %v290, %v290
    %v307 = vpack.c.b16 %v291, %v291
    %v308 = vpack.c.b16 %v292, %v292
    %v309 = vpack.c.b16 %v293, %v293
    %v310 = vpack.c.b16 %v294, %v294
    %v311 = vpack.c.b16 %v295, %v295
    %v312 = vpack.c.b16 %v296, %v296
    %v313 = vpack.c.b16 %v297, %v297
    %330 = vst [vmem:[#allocation7] sm:$0xf] %v298
    %331 = vst [vmem:[#allocation7 + $0x4] sm:$0xf] %v299
    %332 = vst [vmem:[#allocation7 + $0x8] sm:$0xf] %v300
    %333 = vst [vmem:[#allocation7 + $0xc] sm:$0xf] %v301
    %334 = vst [vmem:[#allocation7 + $0x10] sm:$0xf] %v302
    %335 = vst [vmem:[#allocation7 + $0x14] sm:$0xf] %v303
    %336 = vst [vmem:[#allocation7 + $0x18] sm:$0xf] %v304
    %337 = vst [vmem:[#allocation7 + $0x1c] sm:$0xf] %v305
    %338 = vst [vmem:[#allocation7 + $0x20] sm:$0xf] %v306
    %339 = vst [vmem:[#allocation7 + $0x24] sm:$0xf] %v307
    %340 = vst [vmem:[#allocation7 + $0x28] sm:$0xf] %v308
    %341 = vst [vmem:[#allocation7 + $0x2c] sm:$0xf] %v309
    %342 = vst [vmem:[#allocation7 + $0x30] sm:$0xf] %v310
    %343 = vst [vmem:[#allocation7 + $0x34] sm:$0xf] %v311
    %344 = vst [vmem:[#allocation7 + $0x38] sm:$0xf] %v312
    %345 = vst [vmem:[#allocation7 + $0x3c] sm:$0xf] %v313
    // Predicated region
    $region18: #{tpu_custom_call.1} parent=1 // pred_check
      _
    $region19: #{tpu_custom_call.1} parent=1 // pred_check_branch
      %347 = sbr.rel (0) target = $region21
    $region20: #{tpu_custom_call.1} parent=1 // pred_region
      %s349 = ssub.s32 1024, 1024
      %350 = vsyncadd [#allocation4], %s349
      %s351 = sshll.u32 [#allocation7], 4
      %s352 = int_to_ptr.vmem [resolvable:$true] %s351
      %357 = dma.vmem_to_hbm [thread:$0]  %s352, 1024, %s2, [#allocation4], 64, 64, 4
    $region21: #{tpu_custom_call.1} parent=1 // pred_fallthru
      _
    // Predicated region
    $region22: #{tpu_custom_call.1} parent=1 // pred_check
      _
    $region23: #{tpu_custom_call.1} parent=1 // pred_check_branch
      %359 = sbr.rel (0) target = $region25
    $region24: #{tpu_custom_call.1} parent=1 // pred_region
      %360 = dma.done [#allocation4], 1024
    $region25: #{tpu_custom_call.1} parent=1 // pred_fallthru
      _
    %361 = vsyncpa [#allocation3], 1
    %362 = vsyncpa [#allocation6], 1
    %363 = vsyncpa [#allocation4], 1

</llo_original>
